<compile_context>
chip_gen: v7x
topology: tpu7x:2x2x1
jax: 0.10.0
libtpu: 0.0.40
codegen_flags: <defaults>
</compile_context>

<pallas_src>
import functools

import jax
import jax.numpy as jnp
from jax.experimental import pallas as pl
from jax.experimental.pallas import tpu as pltpu


def _round_up(x: int, m: int) -> int:
    return ((x + m - 1) // m) * m


def _pick_tile(aligned: int, unit: int, target: int) -> int:
    """Largest multiple of `unit` that divides `aligned` and is <= target."""
    q = aligned // unit
    best = 1
    for d in range(1, q + 1):
        if q % d == 0 and d * unit <= target:
            best = d
    return best * unit


def _shrink_for_parallelism(aligned: int, unit: int, tile: int) -> int:
    """Largest tile strictly smaller than `tile` that still divides `aligned`."""
    q = aligned // unit
    t = tile // unit
    for d in range(t - 1, 0, -1):
        if q % d == 0:
            return d * unit
    return tile


# ---------------------------------------------------------------------------
# Kernels
# ---------------------------------------------------------------------------
def _linear_kernel_f32_out(x_ref, w_ref, b_ref, o_ref):
    """f32 output: accumulate directly into the resident (tm, tn) output tile."""
    k = pl.program_id(2)

    @pl.when(k == 0)
    def _init():
        o_ref[...] = jnp.zeros_like(o_ref)

    # bf16 (or f32) operands, f32 accumulation on the MXU.
    o_ref[...] += jnp.dot(x_ref[...], w_ref[...], preferred_element_type=jnp.float32)

    @pl.when(k == pl.num_programs(2) - 1)
    def _finalize():
        # Bias added once per output tile, broadcast (1, tn) -> (tm, tn).
        o_ref[...] = o_ref[...] + b_ref[...]


def _linear_kernel_scratch_acc(x_ref, w_ref, b_ref, o_ref, acc_ref):
    """Narrow output dtypes: keep the f32 accumulation in a VMEM scratch."""
    k = pl.program_id(2)

    @pl.when(k == 0)
    def _init():
        acc_ref[...] = jnp.zeros_like(acc_ref)

    acc_ref[...] += jnp.dot(x_ref[...], w_ref[...], preferred_element_type=jnp.float32)

    @pl.when(k == pl.num_programs(2) - 1)
    def _finalize():
        o_ref[...] = (acc_ref[...] + b_ref[...]).astype(o_ref.dtype)


# ---------------------------------------------------------------------------
# One-time parameter preparation (outside the hot path)
# ---------------------------------------------------------------------------
def prepare_linear_params(w, b, *, compute_dtype=jnp.bfloat16):
    """Transpose PyTorch-layout weight (out, in) -> (in, out), pad K/N to
    multiples of 128, cast the weight to the MXU compute dtype.  Bias stays f32.

    Returns (w_t_padded (Kp, Np), b_padded (1, Np) f32, n_out).
    """
    n_out, k_in = w.shape
    kp = _round_up(k_in, 128)
    np_ = _round_up(n_out, 128)
    w_t = jnp.asarray(w, dtype=jnp.float32).T                     # (K, N)
    w_t_p = jnp.pad(w_t, ((0, kp - k_in), (0, np_ - n_out))).astype(compute_dtype)
    b_p = jnp.pad(jnp.asarray(b, dtype=jnp.float32), (0, np_ - n_out)).reshape(1, np_)
    return w_t_p, b_p, n_out


# ---------------------------------------------------------------------------
# Forward wrapper
# ---------------------------------------------------------------------------
@functools.partial(
    jax.jit,
    static_argnames=("n_out", "tm_target", "tn_target", "tk_target", "out_dtype"),
)
def linear_forward(x, w_t_p, b_p, *, n_out,
                   tm_target=512, tn_target=512, tk_target=1024,
                   out_dtype=jnp.float32):
    """y = x @ W.T + b  ==  PyTorch nn.Linear(inSize, outSize)(x).

    x:      (B, K)   float32 activations (cast to the weight's compute dtype).
    w_t_p:  (Kp, Np) pre-padded / pre-transposed weight (from prepare_linear_params).
    b_p:    (1, Np)  pre-padded f32 bias.
    """
    B, K = x.shape
    Kp, Np = w_t_p.shape
    assert b_p.shape == (1, Np)
    assert K <= Kp and n_out <= Np

    # Pad activations only to 8-row / weight-K alignment (zeros are exact for
    # the contraction; padded rows/cols are sliced off below).
    Bp = _round_up(B, 8)
    if Bp != B or Kp != K:
        x = jnp.pad(x, ((0, Bp - B), (0, Kp - K)))
    x = x.astype(w_t_p.dtype)  # bf16 MXU operands; accumulation stays f32 in-kernel.

    # Tiles are divisors of the aligned sizes -> no over-padding of the output.
    tm = _pick_tile(Bp, 8, tm_target)
    tn = _pick_tile(Np, 128, tn_target)
    tk = _pick_tile(Kp, 128, tk_target)

    # v7x has 2 TensorCores: make sure the parallel (M, N) grid exposes >= 2 tiles.
    if (Bp // tm) * (Np // tn) < 2:
        if Np // 128 >= 2:
            tn = _shrink_for_parallelism(Np, 128, tn)
        elif Bp // 8 >= 2:
            tm = _shrink_for_parallelism(Bp, 8, tm)

    grid = (Bp // tm, Np // tn, Kp // tk)

    f32_out = jnp.dtype(out_dtype) == jnp.dtype(jnp.float32)
    kernel = _linear_kernel_f32_out if f32_out else _linear_kernel_scratch_acc
    scratch = [] if f32_out else [pltpu.VMEM((tm, tn), jnp.float32)]

    out = pl.pallas_call(
        kernel,
        out_shape=jax.ShapeDtypeStruct((Bp, Np), out_dtype),
        grid=grid,
        in_specs=[
            pl.BlockSpec((tm, tk), lambda i, j, k: (i, k)),   # activations tile
            pl.BlockSpec((tk, tn), lambda i, j, k: (k, j)),   # weight tile
            pl.BlockSpec((1, tn), lambda i, j, k: (0, j)),    # bias tile (f32)
        ],
        out_specs=pl.BlockSpec((tm, tn), lambda i, j, k: (i, j)),
        scratch_shapes=scratch,
        compiler_params=pltpu.CompilerParams(
            dimension_semantics=("parallel", "parallel", "arbitrary"),
            vmem_limit_bytes=48 * 1024 * 1024,   # explicit; safe on v5e/v6e/v7x
        ),
    )(x, w_t_p, b_p)

    if Bp != B or Np != n_out:
        out = out[:B, :n_out]
    return out


# ---------------------------------------------------------------------------
# Self-test
# ---------------------------------------------------------------------------
if __name__ == "__main__":
    key = jax.random.PRNGKey(0)

    def make_params(kw, kb, in_size, out_size):
        bound = 1.0 / jnp.sqrt(jnp.float32(in_size))
        w = jax.random.uniform(kw, (out_size, in_size), dtype=jnp.float32,
                               minval=-bound, maxval=bound)  # PyTorch (out, in)
        b = jax.random.uniform(kb, (out_size,), dtype=jnp.float32,
                               minval=-bound, maxval=bound)
        return w, b

    # --- Case 1: small shapes implied by the module (batch=8, in=32, out=16). ---
    batch, in_size, out_size = 8, 32, 16
    kx, kw, kb, key = jax.random.split(key, 4)
    x = jax.random.normal(kx, (batch, in_size), dtype=jnp.float32)
    w, b = make_params(kw, kb, in_size, out_size)

    # bf16-compute path (default).
    wp, bp, n_out = prepare_linear_params(w, b)                   # one-time prep
    y = jax.block_until_ready(linear_forward(x, wp, bp, n_out=n_out))
    y_ref_f32 = x @ w.T + b
    y_ref_bf16 = jnp.dot(x.astype(jnp.bfloat16), w.T.astype(jnp.bfloat16),
                         preferred_element_type=jnp.float32) + b
    assert y.shape == (batch, out_size)
    assert jnp.allclose(y, y_ref_bf16, atol=1e-3, rtol=1e-3)       # vs bf16-operand ref
    assert jnp.allclose(y, y_ref_f32, atol=5e-2, rtol=5e-2)        # loose vs f32 ref

    # f32-compute path (exactness gate).
    wp32, bp32, _ = prepare_linear_params(w, b, compute_dtype=jnp.float32)
    y32 = jax.block_until_ready(linear_forward(x, wp32, bp32, n_out=n_out))
    assert jnp.allclose(y32, y_ref_f32, atol=1e-5, rtol=1e-5)

    # --- Case 2: larger shapes that exercise the tiled grid + parallel split. ---
    batch2, in2, out2 = 256, 1024, 384
    kx2, kw2, kb2, key = jax.random.split(key, 4)
    x2 = jax.random.normal(kx2, (batch2, in2), dtype=jnp.float32)
    w2, b2 = make_params(kw2, kb2, in2, out2)

    wp2, bp2, n_out2 = prepare_linear_params(w2, b2)
    y2 = jax.block_until_ready(linear_forward(x2, wp2, bp2, n_out=n_out2))
    y2_ref_bf16 = jnp.dot(x2.astype(jnp.bfloat16), w2.T.astype(jnp.bfloat16),
                          preferred_element_type=jnp.float32) + b2
    y2_ref_f32 = x2 @ w2.T + b2
    assert y2.shape == (batch2, out2)
    assert jnp.allclose(y2, y2_ref_bf16, atol=1e-3, rtol=1e-3)
    assert jnp.allclose(y2, y2_ref_f32, atol=5e-2, rtol=5e-2)

    print("KERNEL_OK")
</pallas_src>

<mosaic_0001>
module attributes {stable_mosaic.version = 11 : i64} {
  func.func @_linear_kernel_f32_out(%arg0: i32, %arg1: i32, %arg2: i32, %arg3: memref<8x128xbf16, #tpu.memory_space<vmem>>, %arg4: memref<128x128xbf16, #tpu.memory_space<vmem>>, %arg5: memref<1x128xf32, #tpu.memory_space<vmem>>, %arg6: memref<8x128xf32, #tpu.memory_space<vmem>>) attributes {dimension_semantics = [#tpu.dimension_semantics<parallel>, #tpu.dimension_semantics<parallel>, #tpu.dimension_semantics<arbitrary>], iteration_bounds = array<i64: 1, 1, 1>, scalar_prefetch = 0 : i64, scratch_operands = 0 : i64, tpu.core_type = #tpu.core_type<tc>, window_params = [{transform_indices = @transform_0, window_bounds = array<i64: 8, 128>}, {transform_indices = @transform_1, window_bounds = array<i64: 128, 128>}, {transform_indices = @transform_2, window_bounds = array<i64: 1, 128>}, {transform_indices = @transform_3, window_bounds = array<i64: 8, 128>}]} {
    %c0_i32 = arith.constant 0 : i32
    %0 = arith.cmpi eq, %arg2, %c0_i32 : i32
    %1 = arith.extui %0 : i1 to i32
    %c0_i32_0 = arith.constant 0 : i32
    %2 = arith.cmpi ne, %1, %c0_i32_0 : i32
    scf.if %2 {
      %cst_10 = arith.constant 0.000000e+00 : f32
      %12 = vector.broadcast %cst_10 : f32 to vector<8x128xf32>
      %c0_11 = arith.constant 0 : index
      %c0_12 = arith.constant 0 : index
      %13 = vector.load %arg6[%c0_11, %c0_12] : memref<8x128xf32, #tpu.memory_space<vmem>>, vector<8x128xf32>
      tpu.vector_store %arg6[%c0_11, %c0_12], %12 {strides = array<i32>} : memref<8x128xf32, #tpu.memory_space<vmem>>, vector<8x128xf32>,
    } else {
    }
    %c0 = arith.constant 0 : index
    %c0_1 = arith.constant 0 : index
    %3 = vector.load %arg6[%c0, %c0_1] : memref<8x128xf32, #tpu.memory_space<vmem>>, vector<8x128xf32>
    %c0_2 = arith.constant 0 : index
    %c0_3 = arith.constant 0 : index
    %4 = vector.load %arg3[%c0_2, %c0_3] : memref<8x128xbf16, #tpu.memory_space<vmem>>, vector<8x128xbf16>
    %c0_4 = arith.constant 0 : index
    %c0_5 = arith.constant 0 : index
    %5 = vector.load %arg4[%c0_4, %c0_5] : memref<128x128xbf16, #tpu.memory_space<vmem>>, vector<128x128xbf16>
    %cst = arith.constant dense<0.000000e+00> : vector<8x128xf32>
    %6 = tpu.matmul %4, %5, %cst {dimension_numbers = #tpu.dot_dimension_numbers<[1], [0], [0], [1], [0, 0, 1, 1], [], []>} : vector<8x128xbf16>, vector<128x128xbf16>, vector<8x128xf32> -> vector<8x128xf32>
    %7 = arith.addf %3, %6 : vector<8x128xf32>
    %c0_6 = arith.constant 0 : index
    %c0_7 = arith.constant 0 : index
    %8 = vector.load %arg6[%c0_6, %c0_7] : memref<8x128xf32, #tpu.memory_space<vmem>>, vector<8x128xf32>
    tpu.vector_store %arg6[%c0_6, %c0_7], %7 {strides = array<i32>} : memref<8x128xf32, #tpu.memory_space<vmem>>, vector<8x128xf32>,
    %c0_i32_8 = arith.constant 0 : i32
    %9 = arith.cmpi eq, %arg2, %c0_i32_8 : i32
    %10 = arith.extui %9 : i1 to i32
    %c0_i32_9 = arith.constant 0 : i32
    %11 = arith.cmpi ne, %10, %c0_i32_9 : i32
    scf.if %11 {
      %c0_10 = arith.constant 0 : index
      %c0_11 = arith.constant 0 : index
      %12 = vector.load %arg6[%c0_10, %c0_11] : memref<8x128xf32, #tpu.memory_space<vmem>>, vector<8x128xf32>
      %c0_12 = arith.constant 0 : index
      %c0_13 = arith.constant 0 : index
      %13 = vector.load %arg5[%c0_12, %c0_13] : memref<1x128xf32, #tpu.memory_space<vmem>>, vector<1x128xf32>
      %14 = vector.broadcast %13 : vector<1x128xf32> to vector<8x128xf32>
      %15 = arith.addf %12, %14 : vector<8x128xf32>
      %c0_14 = arith.constant 0 : index
      %c0_15 = arith.constant 0 : index
      %16 = vector.load %arg6[%c0_14, %c0_15] : memref<8x128xf32, #tpu.memory_space<vmem>>, vector<8x128xf32>
      tpu.vector_store %arg6[%c0_14, %c0_15], %15 {strides = array<i32>} : memref<8x128xf32, #tpu.memory_space<vmem>>, vector<8x128xf32>,
    } else {
    }
    return
  }
  func.func @transform_0(%arg0: i32, %arg1: i32, %arg2: i32) -> (i32, i32) {
    %c0_i32 = arith.constant 0 : i32
    return %arg0, %arg2 : i32, i32
  }
  func.func @transform_1(%arg0: i32, %arg1: i32, %arg2: i32) -> (i32, i32) {
    %c0_i32 = arith.constant 0 : i32
    return %arg2, %arg1 : i32, i32
  }
  func.func @transform_2(%arg0: i32, %arg1: i32, %arg2: i32) -> (i32, i32) {
    %c0_i32 = arith.constant 0 : i32
    %c0_i32_0 = arith.constant 0 : i32
    return %c0_i32, %arg1 : i32, i32
  }
  func.func @transform_3(%arg0: i32, %arg1: i32, %arg2: i32) -> (i32, i32) {
    %c0_i32 = arith.constant 0 : i32
    return %arg0, %arg1 : i32, i32
  }
}

</mosaic_0001>

<llo_original>
// kernel: linear_forward.1
$region0: #{linear_forward.1}
  #allocation0 [shape = 'u32[]', space=smem, size = 0x4, offset = 0x4, fixed_abs, tag = 'smem constant byte address 0x4 - core index']
  #allocation1 [shape = 'u32[144,128]{1,0:T(1,128)}', space=vmem, size = 0x12000, scoped, tag = 'internal scratch']
  %s0 = inlined_call_operand.vmem [shape: bf16[8,128], index: 0, kind: input, shape index: {}]
  %s1 = inlined_call_operand.hbm [shape: bf16[128,128], index: 1, kind: input, shape index: {}]
  %s2 = inlined_call_operand.vmem [shape: f32[1,128], index: 2, kind: input, shape index: {}]
  %s3 = inlined_call_operand.hbm [shape: f32[8,128], index: 3, kind: output, shape index: {}]
  %s4 = sld [smem:[#allocation0]]
  $region34: #{linear_forward.1} parent=0
    _
  %s6 = ssub.s32 1, %s4
  %s7 = scalar_select 0, %s6, %s4
  $region1: #{linear_forward.1} parent=0
    #allocation2 [shape = 'u8[32768]{0}', space=vmem, size = 0x8000, scoped, tag = 'input window, operand 1, single buffered']
    #allocation3 [shape = 's32[1]{0}', space=sflag, size = 0x4, scoped, tag = 'scoped memory for linear_forward.1']
    #allocation4 [shape = 's32[1]{0}', space=sflag, size = 0x4, scoped, tag = 'scoped memory for linear_forward.1']
    #allocation5 [shape = 'u8[4096]{0}', space=vmem, size = 0x1000, scoped, tag = 'output window, operand 0, single buffered']
    %8 = vsyncpa [#allocation3], 0
    %9 = vsyncpa [#allocation4], 0
    // Predicated region
    $region2: #{linear_forward.1} parent=1 // pred_check
      _
    $region3: #{linear_forward.1} parent=1 // pred_check_branch
      %11 = sbr.rel (0) target = $region5
    $region4: #{linear_forward.1} parent=1 // pred_region
      _
    $region5: #{linear_forward.1} parent=1 // pred_fallthru
      _
    // Predicated region
    $region6: #{linear_forward.1} parent=1 // pred_check
      _
    $region7: #{linear_forward.1} parent=1 // pred_check_branch
      %13 = sbr.rel (0) target = $region9
    $region8: #{linear_forward.1} parent=1 // pred_region
      %s15 = ssub.s32 1024, 1024
      %16 = vsyncadd [#allocation3], %s15
      %s17 = sshll.u32 [#allocation2], 4
      %s18 = int_to_ptr.vmem [resolvable:$true] %s17
      %23 = dma.hbm_to_vmem [thread:$0]  %s1, 1024, %s18, [#allocation3], 64, 64, 4
    $region9: #{linear_forward.1} parent=1 // pred_fallthru
      _
    // Predicated region
    $region10: #{linear_forward.1} parent=1 // pred_check
      _
    $region11: #{linear_forward.1} parent=1 // pred_check_branch
      %25 = sbr.rel (0) target = $region13
    $region12: #{linear_forward.1} parent=1 // pred_region
      _
    $region13: #{linear_forward.1} parent=1 // pred_fallthru
      _
    // Predicated region
    $region14: #{linear_forward.1} parent=1 // pred_check
      _
    $region15: #{linear_forward.1} parent=1 // pred_check_branch
      %27 = sbr.rel (0) target = $region17
    $region16: #{linear_forward.1} parent=1 // pred_region
      %28 = dma.done [#allocation3], 1024
    $region17: #{linear_forward.1} parent=1 // pred_fallthru
      _
    %p30 = scmp.eq.s32.totalorder 0, 0
    // Predicated region
    $region18: #{linear_forward.1} parent=1 // pred_check
      %p31 = pneg %p30
    $region19: #{linear_forward.1} parent=1 // pred_check_branch
      %33 = sbr.rel (%p31) target = $region21
    $region20: #{linear_forward.1} parent=1 // pred_region
      %34 = vst [vmem:[#allocation5] sm:$0xff] 0.0
    $region21: #{linear_forward.1} parent=1 // pred_fallthru
      _
    %v35 = vld [vmem:[#allocation5] sm:$0xff]
    %v36 = vld [vmem:[%s0] sm:$0xf]
    %v37 = vld [vmem:[#allocation2] sm:$0xf]
    %v38 = vld [vmem:[#allocation2 + $0x4] sm:$0xf]
    %v39 = vld [vmem:[#allocation2 + $0x8] sm:$0xf]
    %v40 = vld [vmem:[#allocation2 + $0xc] sm:$0xf]
    %v41 = vld [vmem:[#allocation2 + $0x10] sm:$0xf]
    %v42 = vld [vmem:[#allocation2 + $0x14] sm:$0xf]
    %v43 = vld [vmem:[#allocation2 + $0x18] sm:$0xf]
    %v44 = vld [vmem:[#allocation2 + $0x1c] sm:$0xf]
    %v45 = vld [vmem:[#allocation2 + $0x20] sm:$0xf]
    %v46 = vld [vmem:[#allocation2 + $0x24] sm:$0xf]
    %v47 = vld [vmem:[#allocation2 + $0x28] sm:$0xf]
    %v48 = vld [vmem:[#allocation2 + $0x2c] sm:$0xf]
    %v49 = vld [vmem:[#allocation2 + $0x30] sm:$0xf]
    %v50 = vld [vmem:[#allocation2 + $0x34] sm:$0xf]
    %v51 = vld [vmem:[#allocation2 + $0x38] sm:$0xf]
    %v52 = vld [vmem:[#allocation2 + $0x3c] sm:$0xf]
    %v69 = vunpack.c.l.b16 %v37
    %v70 = vunpack.c.l.b16 %v38
    %v71 = vunpack.c.l.b16 %v39
    %v72 = vunpack.c.l.b16 %v40
    %v73 = vunpack.c.l.b16 %v41
    %v74 = vunpack.c.l.b16 %v42
    %v75 = vunpack.c.l.b16 %v43
    %v76 = vunpack.c.l.b16 %v44
    %v77 = vunpack.c.l.b16 %v45
    %v78 = vunpack.c.l.b16 %v46
    %v79 = vunpack.c.l.b16 %v47
    %v80 = vunpack.c.l.b16 %v48
    %v81 = vunpack.c.l.b16 %v49
    %v82 = vunpack.c.l.b16 %v50
    %v83 = vunpack.c.l.b16 %v51
    %v84 = vunpack.c.l.b16 %v52
    %v85 = vpack.c.b16 %v70, %v69
    %v86 = vpack.c.b16 %v72, %v71
    %v87 = vpack.c.b16 %v74, %v73
    %v88 = vpack.c.b16 %v76, %v75
    %v89 = vpack.c.b16 %v78, %v77
    %v90 = vpack.c.b16 %v80, %v79
    %v91 = vpack.c.b16 %v82, %v81
    %v92 = vpack.c.b16 %v84, %v83
    %101 = vmatprep.subr.bf16.mxu0 0
    %102 = vmatpush1.bf16.msra.mxu0 %v85
    %103 = vmatprep.subr.bf16.mxu0 0
    %104 = vmatpush1.bf16.msra.mxu0 %v86
    %105 = vmatprep.subr.bf16.mxu0 0
    %106 = vmatpush1.bf16.msra.mxu0 %v87
    %107 = vmatprep.subr.bf16.mxu0 0
    %108 = vmatpush1.bf16.msra.mxu0 %v88
    %109 = vmatprep.subr.bf16.mxu0 0
    %110 = vmatpush1.bf16.msra.mxu0 %v89
    %111 = vmatprep.subr.bf16.mxu0 0
    %112 = vmatpush1.bf16.msra.mxu0 %v90
    %113 = vmatprep.subr.bf16.mxu0 0
    %114 = vmatpush1.bf16.msra.mxu0 %v91
    %115 = vmatprep.subr.bf16.mxu0 0
    %116 = vmatpush1.bf16.msra.mxu0 %v92
    %117 = vmatprep.subr.bf16.mxu0 0
    %118 = vmatpush1.bf16.msra.mxu0 0
    %119 = vmatprep.subr.bf16.mxu0 0
    %120 = vmatpush1.bf16.msra.mxu0 0
    %121 = vmatprep.subr.bf16.mxu0 0
    %122 = vmatpush1.bf16.msra.mxu0 0
    %123 = vmatprep.subr.bf16.mxu0 0
    %124 = vmatpush1.bf16.msra.mxu0 0
    %125 = vmatprep.subr.bf16.mxu0 0
    %126 = vmatpush1.bf16.msra.mxu0 0
    %127 = vmatprep.subr.bf16.mxu0 0
    %128 = vmatpush1.bf16.msra.mxu0 0
    %129 = vmatprep.subr.bf16.mxu0 0
    %130 = vmatpush1.bf16.msra.mxu0 0
    %131 = vmatprep.subr.bf16.mxu0 0
    %132 = vmatpush1.bf16.msra.mxu0 0
    %133 = vmatprep.mubr.bf16.mxu0 0
    %134 = vmatmul.mubr.bf16.gmra.mrb[0].mxu0 %v36
    %v135 = vpop.f32.mrb[0].mxu0
    %v136 = vadd.f32 0.0, %v135
    %v137 = vpop.f32.mrb[0].mxu0
    %v138 = vpop.f32.mrb[0].mxu0
    %v139 = vpop.f32.mrb[0].mxu0
    %140 = vdwg.mxu0
    %v141 = vadd.f32 %v35, %v136
    %142 = vst [vmem:[#allocation5] sm:$0xff] %v141
    // Predicated region
    $region22: #{linear_forward.1} parent=1 // pred_check
      %p143 = pneg %p30
    $region23: #{linear_forward.1} parent=1 // pred_check_branch
      %145 = sbr.rel (%p143) target = $region25
    $region24: #{linear_forward.1} parent=1 // pred_region
      %v146 = vld [vmem:[#allocation5] sm:$0xff]
      %v147 = vld [vmem:[%s2] sm:$0x1]
      %v149 = vlaneseq
      %v150 = vshrl.u32 %v149, 7
      %v151 = vsub.s32 0, %v150
      %v152 = vrot.slane %v147, %v151
      %v154 = vadd.f32 %v146, %v152
      %155 = vst [vmem:[#allocation5] sm:$0xff] %v154
    $region25: #{linear_forward.1} parent=1 // pred_fallthru
      _
    // Predicated region
    $region26: #{linear_forward.1} parent=1 // pred_check
      _
    $region27: #{linear_forward.1} parent=1 // pred_check_branch
      %157 = sbr.rel (0) target = $region29
    $region28: #{linear_forward.1} parent=1 // pred_region
      %s159 = ssub.s32 128, 128
      %160 = vsyncadd [#allocation4], %s159
      %s162 = sshll.u32 [#allocation5], 4
      %s163 = int_to_ptr.vmem [resolvable:$true] %s162
      %165 = dma.vmem_to_hbm [thread:$0]  %s163, 128, %s3, [#allocation4]
    $region29: #{linear_forward.1} parent=1 // pred_fallthru
      _
    // Predicated region
    $region30: #{linear_forward.1} parent=1 // pred_check
      _
    $region31: #{linear_forward.1} parent=1 // pred_check_branch
      %167 = sbr.rel (0) target = $region33
    $region32: #{linear_forward.1} parent=1 // pred_region
      %168 = dma.done [#allocation4], 128
    $region33: #{linear_forward.1} parent=1 // pred_fallthru
      _
    %169 = vsyncpa [#allocation3], 1
    %170 = vsyncpa [#allocation4], 1

</llo_original>
